<compile_context>
chip_gen: v7x
topology: tpu7x:2x2x1
jax: 0.10.0
libtpu: 0.0.40
codegen_flags: <defaults>
</compile_context>

<pallas_src>
import functools

import jax
import jax.numpy as jnp
from jax import lax
from jax.experimental import pallas as pl
from jax.experimental.pallas import tpu as pltpu


def _round_up(x, m):
    return (x + m - 1) // m * m


def _block_major(w2d, tn):
    """(K, N) -> (N//tn, K, tn): each (K, tn) weight tile is contiguous in HBM."""
    K, N = w2d.shape
    assert N % tn == 0
    return jnp.transpose(w2d.reshape(K, N // tn, tn), (1, 0, 2))


# -----------------------------------------------------------------------------
# Kernel 1: single-shot matmul + bias (+ ReLU) for the conv layers.
#   Full-K block (no accumulator scratch / no k grid axis), block-major weights
#   so every weight tile is a contiguous DMA, bf16 operands, f32 MXU accumulate.
# -----------------------------------------------------------------------------
def _mm_bias_relu_kernel(x_ref, w_ref, b_ref, o_ref, *, relu):
    out = jnp.dot(x_ref[...], w_ref[0], preferred_element_type=jnp.float32)
    out = out + b_ref[...]
    if relu:
        out = jnp.maximum(out, 0.0)
    o_ref[...] = out.astype(o_ref.dtype)


def matmul_bias(x, prep, *, relu, out_dtype=jnp.bfloat16):
    """y = x @ W + b (optionally ReLU) with pre-prepared (padded, bf16, block-major) weights."""
    M, K = x.shape
    assert K == prep["K"], (K, prep["K"])
    Kp, Np, N, tn = prep["Kp"], prep["Np"], prep["N"], prep["tn"]

    tm = min(256, _round_up(M, 16))          # bf16 packs 16 sublanes per vreg
    Mp = _round_up(M, tm)
    xp = x.astype(jnp.bfloat16)
    if (Mp, Kp) != (M, K):
        xp = jnp.pad(xp, ((0, Mp - M), (0, Kp - K)))

    out = pl.pallas_call(
        functools.partial(_mm_bias_relu_kernel, relu=relu),
        out_shape=jax.ShapeDtypeStruct((Mp, Np), out_dtype),
        grid_spec=pltpu.PrefetchScalarGridSpec(
            num_scalar_prefetch=0,
            grid=(Mp // tm, Np // tn),
            in_specs=[
                pl.BlockSpec((tm, Kp), lambda i, j: (i, 0)),
                pl.BlockSpec((1, Kp, tn), lambda i, j: (j, 0, 0)),
                pl.BlockSpec((1, tn), lambda i, j: (0, j)),
            ],
            out_specs=pl.BlockSpec((tm, tn), lambda i, j: (i, j)),
        ),
        compiler_params=pltpu.CompilerParams(
            dimension_semantics=("parallel", "parallel")),
    )(xp, prep["wp"], prep["bp"])
    if (Mp, Np) != (M, N):
        out = out[:M, :N]
    return out


# -----------------------------------------------------------------------------
# Kernel 2: fused MLP tail.
#   linear1 -> ReLU -> linear2 -> ReLU -> [mu|log_sigma_sq] head -> z, KL
#   One 1-D grid: lin1 reduction blocks, lin2 reduction blocks, 1 finalize step.
#   Activations stay resident in VMEM scratch; no dynamic lane-dim indexing.
# -----------------------------------------------------------------------------
def _mlp_head_kernel(x_ref, w1_ref, b1_ref, w2_ref, b2_ref, wh_ref, bh_ref,
                     eps_ref, z_ref, kl_ref, acc_ref, h1_ref, *, nk1, nh, tn, lp):
    s = pl.program_id(0)

    @pl.when(s == 0)
    def _():
        acc_ref[...] = jnp.zeros_like(acc_ref)

    # ---- linear1: accumulate one reduction block ----
    @pl.when(s < nk1)
    def _():
        acc_ref[...] += jnp.dot(x_ref[...], w1_ref[0],
                                preferred_element_type=jnp.float32)

    # ---- linear1 epilogue: bias + ReLU, stash h1 block-major, reset acc ----
    @pl.when(s == nk1 - 1)
    def _():
        h1 = jnp.maximum(acc_ref[...] + b1_ref[...], 0.0).astype(h1_ref.dtype)
        for jb in range(nh):                       # static unroll, static slices
            h1_ref[jb] = h1[:, jb * tn:(jb + 1) * tn]
        acc_ref[...] = jnp.zeros_like(acc_ref)

    # ---- linear2: accumulate one reduction block ----
    @pl.when((s >= nk1) & (s < nk1 + nh))
    def _():
        j = s - nk1
        acc_ref[...] += jnp.dot(h1_ref[j], w2_ref[0],
                                preferred_element_type=jnp.float32)

    # ---- linear2 epilogue + fused [mu | log_sigma_sq] head + sample + KL ----
    @pl.when(s == nk1 + nh)
    def _():
        h2 = jnp.maximum(acc_ref[...] + b2_ref[...], 0.0).astype(jnp.bfloat16)
        head = jnp.dot(h2, wh_ref[...], preferred_element_type=jnp.float32)
        head = head + bh_ref[...]
        mu = head[:, :lp]
        ls = head[:, lp:]
        sd = jnp.exp(0.5 * ls)                     # one EUP exp; sigma_sq = sd*sd
        z_ref[...] = mu + sd * eps_ref[...]
        kl_row = 0.5 * jnp.sum(sd * sd + mu * mu - 1.0 - ls, axis=1, keepdims=True)
        kl_ref[...] = jnp.broadcast_to(kl_row, kl_ref.shape)   # lane-dense store


def mlp_head_sample(x, mp, eps):
    """Returns (z[B, latent], per-row KL[B]) for the fused MLP tail."""
    B, K = x.shape
    assert K == mp["K1"], (K, mp["K1"])
    K1p, H, tn, Lp, latent = mp["K1p"], mp["H"], mp["tn"], mp["Lp"], mp["latent"]
    nk1 = K1p // tn                 # linear1 reduction blocks
    nh = H // tn                    # linear2 reduction blocks / h1 column blocks
    steps = nk1 + nh + 1

    Mp = _round_up(B, 16)
    xp = jnp.pad(x.astype(jnp.bfloat16), ((0, Mp - B), (0, K1p - K)))
    epsp = jnp.pad(eps.astype(jnp.float32), ((0, Mp - B), (0, Lp - latent)))

    z, kl = pl.pallas_call(
        functools.partial(_mlp_head_kernel, nk1=nk1, nh=nh, tn=tn, lp=Lp),
        out_shape=(jax.ShapeDtypeStruct((Mp, Lp), jnp.float32),
                   jax.ShapeDtypeStruct((Mp, 128), jnp.float32)),
        grid_spec=pltpu.PrefetchScalarGridSpec(
            num_scalar_prefetch=0,
            grid=(steps,),
            in_specs=[
                pl.BlockSpec((Mp, tn), lambda s: (0, jnp.minimum(s, nk1 - 1))),
                pl.BlockSpec((1, tn, H), lambda s: (jnp.minimum(s, nk1 - 1), 0, 0)),
                pl.BlockSpec((1, H), lambda s: (0, 0)),
                pl.BlockSpec((1, tn, H),
                             lambda s: (jnp.minimum(jnp.maximum(s - nk1, 0), nh - 1), 0, 0)),
                pl.BlockSpec((1, H), lambda s: (0, 0)),
                pl.BlockSpec((H, 2 * Lp), lambda s: (0, 0)),
                pl.BlockSpec((1, 2 * Lp), lambda s: (0, 0)),
                pl.BlockSpec((Mp, Lp), lambda s: (0, 0)),
            ],
            out_specs=(pl.BlockSpec((Mp, Lp), lambda s: (0, 0)),
                       pl.BlockSpec((Mp, 128), lambda s: (0, 0))),
            scratch_shapes=[pltpu.VMEM((Mp, H), jnp.float32),        # accumulator
                            pltpu.VMEM((nh, Mp, tn), jnp.bfloat16)], # resident h1
        ),
        compiler_params=pltpu.CompilerParams(
            dimension_semantics=("arbitrary",),
            vmem_limit_bytes=40 * 1024 * 1024),
    )(xp, mp["w1"], mp["b1"], mp["w2"], mp["b2"], mp["wh"], mp["bh"], epsp)
    return z[:B, :latent], kl[:B, 0]


# -----------------------------------------------------------------------------
# Glue: nearest interpolation, conv-as-matmul via XLA patch extraction
# -----------------------------------------------------------------------------
def nearest_interpolate_nchw(x, out_hw):
    """torch.nn.functional.interpolate(x, size=out_hw) with default 'nearest'."""
    B, C, H, W = x.shape
    OH, OW = out_hw
    ih = (jnp.arange(OH) * H) // OH
    iw = (jnp.arange(OW) * W) // OW
    return x[:, :, ih[:, None], iw[None, :]]


def conv2d(x_nhwc, prep, *, stride, padding):
    """Conv2d (PyTorch cross-correlation semantics) as patch extraction + Pallas matmul."""
    # TODO(synk): the duplicated patch tensor still round-trips HBM; a kernel-tap
    # grid axis inside the conv matmul would avoid materializing it.
    patches = lax.conv_general_dilated_patches(
        x_nhwc, filter_shape=(prep["kh"], prep["kw"]),
        window_strides=(stride, stride), padding=padding,
        dimension_numbers=("NHWC", "HWIO", "NHWC"))
    B, OH, OW, F = patches.shape
    y = matmul_bias(patches.reshape(B * OH * OW, F), prep, relu=True)
    return y.reshape(B, OH, OW, prep["N"])


# -----------------------------------------------------------------------------
# Parameter construction (deterministic, synthetic — shapes from Encoder.__init__)
# and one-time preparation (pad / transpose / cast to bf16 / block-major).
# -----------------------------------------------------------------------------
def _conv_init(key, cout, cin, kh, kw):
    k1, k2 = jax.random.split(key)
    fan_in = cin * kh * kw
    w = jax.random.normal(k1, (cout, cin, kh, kw), jnp.float32) / jnp.sqrt(fan_in)
    b = jax.random.normal(k2, (cout,), jnp.float32) * 0.01
    return w, b


def _dense_init(key, fan_in, fan_out):
    k1, k2 = jax.random.split(key)
    w = jax.random.normal(k1, (fan_in, fan_out), jnp.float32) / jnp.sqrt(fan_in)
    b = jax.random.normal(k2, (fan_out,), jnp.float32) * 0.01
    return w, b


def init_params(key, latent_dims, flatten_dim, hidden=4096):
    keys = jax.random.split(key, 9)
    return {
        "conv1": _conv_init(keys[0], 96, 1, 11, 11),
        "conv2": _conv_init(keys[1], 256, 96, 5, 5),
        "conv3": _conv_init(keys[2], 384, 256, 3, 3),
        "conv4": _conv_init(keys[3], 384, 384, 3, 3),
        "conv5": _conv_init(keys[4], 256, 384, 3, 3),
        "lin1": _dense_init(keys[5], flatten_dim, hidden),   # LazyLinear
        "lin2": _dense_init(keys[6], hidden, hidden),
        "mu": _dense_init(keys[7], hidden, latent_dims),
        "sigma": _dense_init(keys[8], hidden, latent_dims),
    }


def _prepare_conv(w, b, tn=128):
    Cout, Cin, kh, kw = w.shape
    # patch feature order from conv_general_dilated_patches is (Cin, kh, kw)
    wmat = jnp.transpose(w.reshape(Cout, Cin * kh * kw))     # (Cin*kh*kw, Cout)
    K, N = wmat.shape
    Kp, Np = _round_up(K, 128), _round_up(N, tn)
    wpad = jnp.pad(wmat.astype(jnp.bfloat16), ((0, Kp - K), (0, Np - N)))
    return {"wp": _block_major(wpad, tn),
            "bp": jnp.pad(b.astype(jnp.float32), (0, Np - N)).reshape(1, Np),
            "kh": kh, "kw": kw, "K": K, "N": N, "Kp": Kp, "Np": Np, "tn": tn}


def _prepare_mlp(lin1, lin2, mu, sigma, latent_dims, tn=512):
    (w1, b1), (w2, b2) = lin1, lin2
    (w_mu, b_mu), (w_sig, b_sig) = mu, sigma
    K1, H = w1.shape
    assert w2.shape == (H, H) and H % tn == 0
    K1p = _round_up(K1, tn)
    Lp = _round_up(latent_dims, 128)
    w1p = jnp.pad(w1.astype(jnp.bfloat16), ((0, K1p - K1), (0, 0)))
    wh = jnp.zeros((H, 2 * Lp), jnp.float32)
    wh = wh.at[:, :latent_dims].set(w_mu).at[:, Lp:Lp + latent_dims].set(w_sig)
    bh = jnp.zeros((1, 2 * Lp), jnp.float32)
    bh = bh.at[0, :latent_dims].set(b_mu).at[0, Lp:Lp + latent_dims].set(b_sig)
    return {"w1": w1p.reshape(K1p // tn, tn, H),              # contiguous row blocks
            "b1": b1.astype(jnp.float32).reshape(1, H),
            "w2": w2.astype(jnp.bfloat16).reshape(H // tn, tn, H),
            "b2": b2.astype(jnp.float32).reshape(1, H),
            "wh": wh.astype(jnp.bfloat16), "bh": bh,
            "K1": K1, "K1p": K1p, "H": H, "tn": tn, "Lp": Lp, "latent": latent_dims}


def prepare_params(params, latent_dims):
    """One-time weight prep (outside the forward pass)."""
    prep = {name: _prepare_conv(*params[name])
            for name in ("conv1", "conv2", "conv3", "conv4", "conv5")}
    prep["mlp"] = _prepare_mlp(params["lin1"], params["lin2"],
                               params["mu"], params["sigma"], latent_dims)
    return prep


# -----------------------------------------------------------------------------
# Encoder forward (interpolate=True, sample=True)
# -----------------------------------------------------------------------------
def encoder_forward(prep, x_nchw, eps, *, input_size):
    x = nearest_interpolate_nchw(x_nchw, input_size)
    x = jnp.transpose(x, (0, 2, 3, 1)).astype(jnp.bfloat16)          # NCHW -> NHWC
    x = conv2d(x, prep["conv1"], stride=4, padding="VALID")
    x = conv2d(x, prep["conv2"], stride=2, padding="VALID")
    x = conv2d(x, prep["conv3"], stride=2, padding="VALID")
    x = conv2d(x, prep["conv4"], stride=1, padding="SAME")           # padding='same'
    x = conv2d(x, prep["conv5"], stride=2, padding="VALID")
    # torch.nn.Flatten on NCHW activations: channel-major flatten
    x = jnp.transpose(x, (0, 3, 1, 2)).reshape(x.shape[0], -1)
    assert x.shape[1] == prep["mlp"]["K1"], (x.shape, prep["mlp"]["K1"])
    z, kl_rows = mlp_head_sample(x, prep["mlp"], eps)
    return z, jnp.mean(kl_rows)


if __name__ == "__main__":
    key = jax.random.PRNGKey(0)
    kx, keps, kp = jax.random.split(key, 3)

    batch = 2
    latent_dims = 128
    # Smaller input_size than the PyTorch default (224, 224) to keep shapes small;
    # conv stack: 96 -> 22 -> 9 -> 4 -> 4 -> 1, flatten = 256*1*1 = 256.
    input_size = (96, 96)

    def _co(h, k, s):
        return (h - k) // s + 1

    oh = _co(_co(_co(_co(input_size[0], 11, 4), 5, 2), 3, 2), 3, 2)
    ow = _co(_co(_co(_co(input_size[1], 11, 4), 5, 2), 3, 2), 3, 2)
    flatten_dim = 256 * oh * ow

    x = jax.random.normal(kx, (batch, 1, 50, 50), jnp.float32)
    eps = jax.random.normal(keps, (batch, latent_dims), jnp.float32)

    params = init_params(kp, latent_dims, flatten_dim)
    prep = prepare_params(params, latent_dims)   # one-time pad / bf16 / block-major shuffle

    z, kl = encoder_forward(prep, x, eps, input_size=input_size)
    jax.block_until_ready((z, kl))
    assert z.shape == (batch, latent_dims)
    assert kl.shape == ()
    assert bool(jnp.all(jnp.isfinite(z))) and bool(jnp.isfinite(kl))
    print("KERNEL_OK")
</pallas_src>

<mosaic_0001>
module attributes {stable_mosaic.version = 11 : i64} {
  func.func @_mm_bias_relu_kernel(%arg0: i32, %arg1: i32, %arg2: memref<256x128xbf16, #tpu.memory_space<vmem>>, %arg3: memref<1x128x128xbf16, #tpu.memory_space<vmem>>, %arg4: memref<1x128xf32, #tpu.memory_space<vmem>>, %arg5: memref<256x128xbf16, #tpu.memory_space<vmem>>) attributes {dimension_semantics = [#tpu.dimension_semantics<parallel>, #tpu.dimension_semantics<parallel>], iteration_bounds = array<i64: 4, 1>, scalar_prefetch = 0 : i64, scratch_operands = 0 : i64, tpu.core_type = #tpu.core_type<tc>, window_params = [{transform_indices = @transform_0, window_bounds = array<i64: 256, 128>}, {transform_indices = @transform_1, window_bounds = array<i64: 1, 128, 128>}, {transform_indices = @transform_2, window_bounds = array<i64: 1, 128>}, {transform_indices = @transform_3, window_bounds = array<i64: 256, 128>}]} {
    %c0 = arith.constant 0 : index
    %c0_0 = arith.constant 0 : index
    %0 = vector.load %arg2[%c0, %c0_0] : memref<256x128xbf16, #tpu.memory_space<vmem>>, vector<256x128xbf16>
    %c0_1 = arith.constant 0 : index
    %c0_2 = arith.constant 0 : index
    %c0_3 = arith.constant 0 : index
    %1 = vector.load %arg3[%c0_1, %c0_2, %c0_3] : memref<1x128x128xbf16, #tpu.memory_space<vmem>>, vector<1x128x128xbf16>
    %2 = vector.shape_cast %1 : vector<1x128x128xbf16> to vector<128x128xbf16>
    %cst = arith.constant dense<0.000000e+00> : vector<256x128xf32>
    %3 = tpu.matmul %0, %2, %cst {dimension_numbers = #tpu.dot_dimension_numbers<[1], [0], [0], [1], [0, 0, 1, 1], [], []>} : vector<256x128xbf16>, vector<128x128xbf16>, vector<256x128xf32> -> vector<256x128xf32>
    %c0_4 = arith.constant 0 : index
    %c0_5 = arith.constant 0 : index
    %4 = vector.load %arg4[%c0_4, %c0_5] : memref<1x128xf32, #tpu.memory_space<vmem>>, vector<1x128xf32>
    %5 = vector.broadcast %4 : vector<1x128xf32> to vector<256x128xf32>
    %6 = arith.addf %3, %5 : vector<256x128xf32>
    %cst_6 = arith.constant 0.000000e+00 : f32
    %7 = vector.broadcast %cst_6 : f32 to vector<256x128xf32>
    %8 = arith.maximumf %6, %7 : vector<256x128xf32>
    %9 = arith.truncf %8 : vector<256x128xf32> to vector<256x128xbf16>
    %c0_7 = arith.constant 0 : index
    %c0_8 = arith.constant 0 : index
    %10 = vector.load %arg5[%c0_7, %c0_8] : memref<256x128xbf16, #tpu.memory_space<vmem>>, vector<256x128xbf16>
    tpu.vector_store %arg5[%c0_7, %c0_8], %9 {strides = array<i32>} : memref<256x128xbf16, #tpu.memory_space<vmem>>, vector<256x128xbf16>,
    return
  }
  func.func @transform_0(%arg0: i32, %arg1: i32) -> (i32, i32) {
    %c0_i32 = arith.constant 0 : i32
    %c0_i32_0 = arith.constant 0 : i32
    return %arg0, %c0_i32 : i32, i32
  }
  func.func @transform_1(%arg0: i32, %arg1: i32) -> (i32, i32, i32) {
    %c0_i32 = arith.constant 0 : i32
    %c0_i32_0 = arith.constant 0 : i32
    %c0_i32_1 = arith.constant 0 : i32
    return %arg1, %c0_i32, %c0_i32_0 : i32, i32, i32
  }
  func.func @transform_2(%arg0: i32, %arg1: i32) -> (i32, i32) {
    %c0_i32 = arith.constant 0 : i32
    %c0_i32_0 = arith.constant 0 : i32
    return %c0_i32, %arg1 : i32, i32
  }
  func.func @transform_3(%arg0: i32, %arg1: i32) -> (i32, i32) {
    %c0_i32 = arith.constant 0 : i32
    return %arg0, %arg1 : i32, i32
  }
}

</mosaic_0001>

<llo_original>
// kernel: tpu_custom_call.1
$region0: #{tpu_custom_call.1}
  #allocation0 [shape = 'u32[]', space=smem, size = 0x4, offset = 0x4, fixed_abs, tag = 'smem constant byte address 0x4 - core index']
  #allocation1 [shape = 'u32[144,128]{1,0:T(1,128)}', space=vmem, size = 0x12000, scoped, tag = 'internal scratch']
  %s0 = inlined_call_operand.hbm [shape: bf16[1024,128], index: 0, kind: input, shape index: {}]
  %s1 = inlined_call_operand.hbm [shape: bf16[1,128,128], index: 1, kind: input, shape index: {}]
  %s2 = inlined_call_operand.vmem [shape: f32[1,128], index: 2, kind: input, shape index: {}]
  %s3 = inlined_call_operand.hbm [shape: bf16[1024,128], index: 3, kind: output, shape index: {}]
  %s4 = sld [smem:[#allocation0]]
  $region53: #{tpu_custom_call.1} parent=0
    _
  %s6 = ssub.s32 1, %s4
  %s7 = scalar_select 0, %s6, %s4
  $region1: #{tpu_custom_call.1} parent=0
    #allocation2 [shape = 'u8[131072]{0}', space=vmem, size = 0x20000, scoped, tag = 'input window, operand 0']
    #allocation3 [shape = 's32[2]{0}', space=sflag, size = 0x8, scoped, tag = 'scoped memory for tpu_custom_call.1']
    #allocation4 [shape = 's32[2]{0}', space=sflag, size = 0x8, scoped, tag = 'scoped memory for tpu_custom_call.1']
    #allocation5 [shape = 'u8[32768]{0}', space=vmem, size = 0x8000, scoped, tag = 'input window, operand 1, single buffered']
    #allocation6 [shape = 's32[1]{0}', space=sflag, size = 0x4, scoped, tag = 'scoped memory for tpu_custom_call.1']
    #allocation7 [shape = 'u8[131072]{0}', space=vmem, size = 0x20000, scoped, tag = 'output window, operand 0']
    %8 = vsyncpa [#allocation3], 0
    %s9 = scalar_lea.sflag [#allocation3], 1
    %10 = vsyncpa %s9, 0
    %11 = vsyncpa [#allocation6], 0
    %12 = vsyncpa [#allocation4], 0
    %s13 = scalar_lea.sflag [#allocation4], 1
    %14 = vsyncpa %s13, 0
    loop: start=0, step=1, limit=6
    $region2: #{tpu_custom_call.1} parent=1 // loop_pre_header
      _
    $region3: #{tpu_custom_call.1} parent=1 // loop_header
      %s16 = sphi 0, %s20
      %p17 = scmp.ge.s32.totalorder %s16, 6
      %s23 = sphi 0, %s35
      %s24 = sphi 0, %s31
      %s25 = sphi 0, %s23
      %s26 = sphi 0, %s24
      %s27 = sphi 0, %s25
      %s28 = sphi 0, %s26
      %s38 = sphi 0, %s40
      %s41 = sphi 0, %s38
      %s42 = sphi 0, %s41
      %s58 = sphi 0, %s42
      %s64 = sphi 0, %s66
      %s67 = sphi 0, %s64
      %s68 = sphi 0, %s67
      %s84 = sphi 0, %s68
      %s90 = sphi 0, %s92
      %s93 = sphi 0, %s90
      %s94 = sphi 0, %s93
      %s110 = sphi 0, %s94
      %s118 = sphi 0, %s120
      %s121 = sphi 0, %s118
      %s122 = sphi 0, %s121
      %s138 = sphi 0, %s122
    $region4: #{tpu_custom_call.1} parent=1 // loop_header_branch
      %19 = sbr.rel (%p17) target = $region8
    $region5: #{tpu_custom_call.1} parent=1 // loop_body
      %s21 = ssub.s32 %s16, 1
      %s22 = ssub.s32 %s16, 2
      %s29 = sadd.s32 1, %s24
      %p30 = scmp.ge.s32.totalorder %s29, 1
      %s31 = scalar_select %p30, 0, %s29
      %s32 = sadd.s32 1, %s23
      %s33 = scalar_select %p30, %s32, %s23
      %p34 = scmp.ge.s32.totalorder %s33, 4
      %s35 = scalar_select %p34, 0, %s33
      %s36 = ssub.s32 %s23, %s35
      %p37 = scmp.eq.s32.totalorder %s36, 0
      %s39 = sadd.s32 %s38, 1
      %s40 = scalar_select %p37, %s38, %s39
      %p43 = pneg %p37
      %p44 = scmp.eq.s32.totalorder %s16, 3
      %p45 = por %p43, %p44
      %p46 = scmp.ne.s32.totalorder %s38, %s41
      %p47 = scmp.eq.s32.totalorder %s16, 0
      %p48 = por %p46, %p47
      %p49 = scmp.ne.s32.totalorder %s38, %s41
      %p50 = scmp.eq.s32.totalorder %s21, 3
      %p51 = por %p49, %p50
      %p52 = scmp.ne.s32.totalorder %s41, %s42
      %p53 = scmp.eq.s32.totalorder %s21, 0
      %p54 = por %p52, %p53
      %p55 = scmp.ne.s32.totalorder %s41, %s42
      %p56 = scmp.eq.s32.totalorder %s22, 3
      %p57 = por %p55, %p56
      %p59 = scmp.ne.s32.totalorder %s42, %s58
      %p60 = scmp.eq.s32.totalorder %s22, 0
      %p61 = por %p59, %p60
      %s62 = ssub.s32 %s24, %s31
      %p63 = scmp.eq.s32.totalorder %s62, 0
      %s65 = sadd.s32 %s64, 1
      %s66 = scalar_select %p63, %s64, %s65
      %p69 = pneg %p63
      %p70 = scmp.eq.s32.totalorder %s16, 3
      %p71 = por %p69, %p70
      %p72 = scmp.ne.s32.totalorder %s64, %s67
      %p73 = scmp.eq.s32.totalorder %s16, 0
      %p74 = por %p72, %p73
      %p75 = scmp.ne.s32.totalorder %s64, %s67
      %p76 = scmp.eq.s32.totalorder %s21, 3
      %p77 = por %p75, %p76
      %p78 = scmp.ne.s32.totalorder %s67, %s68
      %p79 = scmp.eq.s32.totalorder %s21, 0
      %p80 = por %p78, %p79
      %p81 = scmp.ne.s32.totalorder %s67, %s68
      %p82 = scmp.eq.s32.totalorder %s22, 3
      %p83 = por %p81, %p82
      %p85 = scmp.ne.s32.totalorder %s68, %s84
      %p86 = scmp.eq.s32.totalorder %s22, 0
      %p87 = por %p85, %p86
      %s88 = ssub.s32 %s24, %s31
      %p89 = scmp.eq.s32.totalorder %s88, 0
      %s91 = sadd.s32 %s90, 1
      %s92 = scalar_select %p89, %s90, %s91
      %p95 = pneg %p89
      %p96 = scmp.eq.s32.totalorder %s16, 3
      %p97 = por %p95, %p96
      %p98 = scmp.ne.s32.totalorder %s90, %s93
      %p99 = scmp.eq.s32.totalorder %s16, 0
      %p100 = por %p98, %p99
      %p101 = scmp.ne.s32.totalorder %s90, %s93
      %p102 = scmp.eq.s32.totalorder %s21, 3
      %p103 = por %p101, %p102
      %p104 = scmp.ne.s32.totalorder %s93, %s94
      %p105 = scmp.eq.s32.totalorder %s21, 0
      %p106 = por %p104, %p105
      %p107 = scmp.ne.s32.totalorder %s93, %s94
      %p108 = scmp.eq.s32.totalorder %s22, 3
      %p109 = por %p107, %p108
      %p111 = scmp.ne.s32.totalorder %s94, %s110
      %p112 = scmp.eq.s32.totalorder %s22, 0
      %p113 = por %p111, %p112
      %s114 = ssub.s32 %s23, %s35
      %s115 = ssub.s32 %s24, %s31
      %s116 = sor.u32 %s114, %s115
      %p117 = scmp.eq.s32.totalorder %s116, 0
      %s119 = sadd.s32 %s118, 1
      %s120 = scalar_select %p117, %s118, %s119
      %p123 = pneg %p117
      %p124 = scmp.eq.s32.totalorder %s16, 3
      %p125 = por %p123, %p124
      %p126 = scmp.ne.s32.totalorder %s118, %s121
      %p127 = scmp.eq.s32.totalorder %s16, 0
      %p128 = por %p126, %p127
      %p129 = scmp.ne.s32.totalorder %s118, %s121
      %p130 = scmp.eq.s32.totalorder %s21, 3
      %p131 = por %p129, %p130
      %p132 = scmp.ne.s32.totalorder %s121, %s122
      %p133 = scmp.eq.s32.totalorder %s21, 0
      %p134 = por %p132, %p133
      %p135 = scmp.ne.s32.totalorder %s121, %s122
      %p136 = scmp.eq.s32.totalorder %s22, 3
      %p137 = por %p135, %p136
      %p139 = scmp.ne.s32.totalorder %s122, %s138
      %p140 = scmp.eq.s32.totalorder %s22, 0
      %p141 = por %p139, %p140
      %p142 = scmp.le.s32.totalorder 1, %s16
      %p143 = scmp.lt.s32.totalorder %s16, 5
      %p144 = pnand %p142, %p143
      %p145 = pneg %p144
      // Predicated region
      $region9: #{tpu_custom_call.1} parent=5 // pred_check
        _
      $region10: #{tpu_custom_call.1} parent=5 // pred_check_branch
        %147 = sbr.rel (%p144) target = $region12
      $region11: #{tpu_custom_call.1} parent=5 // pred_region
        %s148 = ssub.s32 %s16, 1
        // Predicated region
        $region13: #{tpu_custom_call.1} parent=11 // pred_check
          %p149 = pneg %p80
        $region14: #{tpu_custom_call.1} parent=11 // pred_check_branch
          %151 = sbr.rel (%p149) target = $region16
        $region15: #{tpu_custom_call.1} parent=11 // pred_region
          %s153 = ssub.s32 1024, 1024
          %154 = vsyncadd [#allocation6], %s153
          %s155 = smul.addr %s26, 16
          %s156 = smul.addr %s155, 64
          %s157 = scalar_lea.hbm %s1, %s156
          %s158 = sshll.u32 [#allocation5], 4
          %s159 = int_to_ptr.vmem [resolvable:$true] %s158
          %164 = dma.hbm_to_vmem [thread:$0]  %s157, 1024, %s159, [#allocation6], 64, 64, 4
        $region16: #{tpu_custom_call.1} parent=11 // pred_fallthru
          _
        // Predicated region
        $region17: #{tpu_custom_call.1} parent=11 // pred_check
          %p165 = pneg %p106
        $region18: #{tpu_custom_call.1} parent=11 // pred_check_branch
          %167 = sbr.rel (%p165) target = $region20
        $region19: #{tpu_custom_call.1} parent=11 // pred_region
          %p168 = scmp.lt.s32.totalorder %s26, 0
          %s169 = scalar_select %p168, %s26, 0
          %s170 = scalar_lea.vmem %s2, %s169
        $region20: #{tpu_custom_call.1} parent=11 // pred_fallthru
          _
      $region12: #{tpu_custom_call.1} parent=5 // pred_fallthru
        _
      %p171 = scmp.lt.s32.totalorder %s16, 4
      // Predicated region
      $region21: #{tpu_custom_call.1} parent=5 // pred_check
        %p172 = pneg %p171
      $region22: #{tpu_custom_call.1} parent=5 // pred_check_branch
        %174 = sbr.rel (%p172) target = $region24
      $region23: #{tpu_custom_call.1} parent=5 // pred_region
        // Predicated region
        $region25: #{tpu_custom_call.1} parent=23 // pred_check
          %p175 = pneg %p48
        $region26: #{tpu_custom_call.1} parent=23 // pred_check_branch
          %177 = sbr.rel (%p175) target = $region28
        $region27: #{tpu_custom_call.1} parent=23 // pred_region
          %s178 = sand.u32 %s38, 1
          %s179 = scalar_lea.sflag [#allocation3], %s178
          %s180 = sand.u32 %s38, 1
          %s181 = smul.addr %s180, 128
          %s182 = scalar_lea.vmem [#allocation2], %s181
          %s183 = smul.u32 32, %s23
          %s185 = ssub.s32 2048, 2048
          %186 = vsyncadd %s179, %s185
          %s187 = smul.addr %s183, 64
          %s188 = scalar_lea.hbm %s0, %s187
          %s189 = sshll.u32 %s182, 4
          %s190 = int_to_ptr.vmem [resolvable:$true] %s189
          %195 = dma.hbm_to_vmem [thread:$0]  %s188, 2048, %s190, %s179, 64, 64, 4
        $region28: #{tpu_custom_call.1} parent=23 // pred_fallthru
          _
      $region24: #{tpu_custom_call.1} parent=5 // pred_fallthru
        _
      %p196 = scmp.le.s32.totalorder 1, %s16
      %p197 = scmp.lt.s32.totalorder %s16, 5
      %p198 = pnand %p196, %p197
      %p199 = pneg %p198
      // Predicated region
      $region29: #{tpu_custom_call.1} parent=5 // pred_check
        _
      $region30: #{tpu_custom_call.1} parent=5 // pred_check_branch
        %201 = sbr.rel (%p198) target = $region32
      $region31: #{tpu_custom_call.1} parent=5 // pred_region
        %s202 = ssub.s32 %s16, 1
        %s203 = sand.u32 %s41, 1
        %s204 = scalar_lea.sflag [#allocation3], %s203
        %s205 = sand.u32 %s41, 1
        %s206 = smul.addr %s205, 128
        %s207 = scalar_lea.vmem [#allocation2], %s206
        // Predicated region
        $region33: #{tpu_custom_call.1} parent=31 // pred_check
          %p208 = pneg %p54
        $region34: #{tpu_custom_call.1} parent=31 // pred_check_branch
          %210 = sbr.rel (%p208) target = $region36
        $region35: #{tpu_custom_call.1} parent=31 // pred_region
          %211 = dma.done %s204, 2048
        $region36: #{tpu_custom_call.1} parent=31 // pred_fallthru
          _
        // Predicated region
        $region37: #{tpu_custom_call.1} parent=31 // pred_check
          %p212 = pneg %p80
        $region38: #{tpu_custom_call.1} parent=31 // pred_check_branch
          %214 = sbr.rel (%p212) target = $region40
        $region39: #{tpu_custom_call.1} parent=31 // pred_region
          %215 = dma.done [#allocation6], 1024
        $region40: #{tpu_custom_call.1} parent=31 // pred_fallthru
          _
        %s216 = sand.u32 %s41, 1
        %s217 = scalar_lea.sflag [#allocation3], %s216
        %s218 = sand.u32 %s41, 1
        %s219 = smul.addr %s218, 128
        %s220 = scalar_lea.vmem [#allocation2], %s219
        %p221 = pneg %p54
        %p222 = pneg %p51
        %p223 = pneg %p80
        %p224 = pneg %p77
        %p225 = scmp.lt.s32.totalorder %s26, 0
        %s226 = scalar_select %p225, %s26, 0
        %s227 = scalar_lea.vmem %s2, %s226
        %p228 = pneg %p106
        %p229 = pneg %p103
        %p230 = pneg %p134
        %p231 = pneg %p131
        %s232 = sand.u32 %s121, 1
        %s233 = scalar_lea.sflag [#allocation4], %s232
        %s234 = sand.u32 %s121, 1
        %s235 = smul.addr %s234, 128
        %s236 = scalar_lea.vmem [#allocation7], %s235
        %s237 = smul.u32 32, %s25
        %p238 = scmp.lt.s32.totalorder %s26, 0
        %s239 = scalar_select %p238, %s26, 0
        %s240 = scalar_lea.vmem %s2, %s239
        %s241 = smul.u32 32, %s25
        %v243 = vld [vmem:[%s207] sm:$0xf]
        %v244 = vld [vmem:[%s207 + $0x4] sm:$0xf]
        %v245 = vld [vmem:[%s207 + $0x8] sm:$0xf]
        %v246 = vld [vmem:[%s207 + $0xc] sm:$0xf]
        %v247 = vld [vmem:[%s207 + $0x10] sm:$0xf]
        %v248 = vld [vmem:[%s207 + $0x14] sm:$0xf]
        %v249 = vld [vmem:[%s207 + $0x18] sm:$0xf]
        %v250 = vld [vmem:[%s207 + $0x1c] sm:$0xf]
        %v251 = vld [vmem:[%s207 + $0x20] sm:$0xf]
        %v252 = vld [vmem:[%s207 + $0x24] sm:$0xf]
        %v253 = vld [vmem:[%s207 + $0x28] sm:$0xf]
        %v254 = vld [vmem:[%s207 + $0x2c] sm:$0xf]
        %v255 = vld [vmem:[%s207 + $0x30] sm:$0xf]
        %v256 = vld [vmem:[%s207 + $0x34] sm:$0xf]
        %v257 = vld [vmem:[%s207 + $0x38] sm:$0xf]
        %v258 = vld [vmem:[%s207 + $0x3c] sm:$0xf]
        %v259 = vld [vmem:[%s207 + $0x40] sm:$0xf]
        %v260 = vld [vmem:[%s207 + $0x44] sm:$0xf]
        %v261 = vld [vmem:[%s207 + $0x48] sm:$0xf]
        %v262 = vld [vmem:[%s207 + $0x4c] sm:$0xf]
        %v263 = vld [vmem:[%s207 + $0x50] sm:$0xf]
        %v264 = vld [vmem:[%s207 + $0x54] sm:$0xf]
        %v265 = vld [vmem:[%s207 + $0x58] sm:$0xf]
        %v266 = vld [vmem:[%s207 + $0x5c] sm:$0xf]
        %v267 = vld [vmem:[%s207 + $0x60] sm:$0xf]
        %v268 = vld [vmem:[%s207 + $0x64] sm:$0xf]
        %v269 = vld [vmem:[%s207 + $0x68] sm:$0xf]
        %v270 = vld [vmem:[%s207 + $0x6c] sm:$0xf]
        %v271 = vld [vmem:[%s207 + $0x70] sm:$0xf]
        %v272 = vld [vmem:[%s207 + $0x74] sm:$0xf]
        %v273 = vld [vmem:[%s207 + $0x78] sm:$0xf]
        %v274 = vld [vmem:[%s207 + $0x7c] sm:$0xf]
        %v275 = vld [vmem:[#allocation5] sm:$0xf]
        %v276 = vld [vmem:[#allocation5 + $0x4] sm:$0xf]
        %v277 = vld [vmem:[#allocation5 + $0x8] sm:$0xf]
        %v278 = vld [vmem:[#allocation5 + $0xc] sm:$0xf]
        %v279 = vld [vmem:[#allocation5 + $0x10] sm:$0xf]
        %v280 = vld [vmem:[#allocation5 + $0x14] sm:$0xf]
        %v281 = vld [vmem:[#allocation5 + $0x18] sm:$0xf]
        %v282 = vld [vmem:[#allocation5 + $0x1c] sm:$0xf]
        %v283 = vld [vmem:[#allocation5 + $0x20] sm:$0xf]
        %v284 = vld [vmem:[#allocation5 + $0x24] sm:$0xf]
        %v285 = vld [vmem:[#allocation5 + $0x28] sm:$0xf]
        %v286 = vld [vmem:[#allocation5 + $0x2c] sm:$0xf]
        %v287 = vld [vmem:[#allocation5 + $0x30] sm:$0xf]
        %v288 = vld [vmem:[#allocation5 + $0x34] sm:$0xf]
        %v289 = vld [vmem:[#allocation5 + $0x38] sm:$0xf]
        %v290 = vld [vmem:[#allocation5 + $0x3c] sm:$0xf]
        %v291 = vld [vmem:[%s240] sm:$0x1]
        %v293 = vlaneseq
        %v294 = vshrl.u32 %v293, 7
        %v295 = vsub.s32 0, %v294
        %v296 = vrot.slane %v291, %v295
        %v330 = vunpack.c.l.b16 %v243
        %v331 = vunpack.c.l.b16 %v244
        %v332 = vunpack.c.l.b16 %v245
        %v333 = vunpack.c.l.b16 %v246
        %v334 = vunpack.c.l.b16 %v247
        %v335 = vunpack.c.l.b16 %v248
        %v336 = vunpack.c.l.b16 %v249
        %v337 = vunpack.c.l.b16 %v250
        %v338 = vunpack.c.l.b16 %v251
        %v339 = vunpack.c.l.b16 %v252
        %v340 = vunpack.c.l.b16 %v253
        %v341 = vunpack.c.l.b16 %v254
        %v342 = vunpack.c.l.b16 %v255
        %v343 = vunpack.c.l.b16 %v256
        %v344 = vunpack.c.l.b16 %v257
        %v345 = vunpack.c.l.b16 %v258
        %v346 = vunpack.c.l.b16 %v259
        %v347 = vunpack.c.l.b16 %v260
        %v348 = vunpack.c.l.b16 %v261
        %v349 = vunpack.c.l.b16 %v262
        %v350 = vunpack.c.l.b16 %v263
        %v351 = vunpack.c.l.b16 %v264
        %v352 = vunpack.c.l.b16 %v265
        %v353 = vunpack.c.l.b16 %v266
        %v354 = vunpack.c.l.b16 %v267
        %v355 = vunpack.c.l.b16 %v268
        %v356 = vunpack.c.l.b16 %v269
        %v357 = vunpack.c.l.b16 %v270
        %v358 = vunpack.c.l.b16 %v271
        %v359 = vunpack.c.l.b16 %v272
        %v360 = vunpack.c.l.b16 %v273
        %v361 = vunpack.c.l.b16 %v274
        %v362 = vpack.c.b16 %v331, %v330
        %v363 = vpack.c.b16 %v333, %v332
        %v364 = vpack.c.b16 %v335, %v334
        %v365 = vpack.c.b16 %v337, %v336
        %v366 = vpack.c.b16 %v339, %v338
        %v367 = vpack.c.b16 %v341, %v340
        %v368 = vpack.c.b16 %v343, %v342
        %v369 = vpack.c.b16 %v345, %v344
        %v370 = vpack.c.b16 %v347, %v346
        %v371 = vpack.c.b16 %v349, %v348
        %v372 = vpack.c.b16 %v351, %v350
        %v373 = vpack.c.b16 %v353, %v352
        %v374 = vpack.c.b16 %v355, %v354
        %v375 = vpack.c.b16 %v357, %v356
        %v376 = vpack.c.b16 %v359, %v358
        %v377 = vpack.c.b16 %v361, %v360
        %v410 = vunpack.c.l.b16 %v275
        %v411 = vunpack.c.l.b16 %v276
        %v412 = vunpack.c.l.b16 %v277
        %v413 = vunpack.c.l.b16 %v278
        %v414 = vunpack.c.l.b16 %v279
        %v415 = vunpack.c.l.b16 %v280
        %v416 = vunpack.c.l.b16 %v281
        %v417 = vunpack.c.l.b16 %v282
        %v418 = vunpack.c.l.b16 %v283
        %v419 = vunpack.c.l.b16 %v284
        %v420 = vunpack.c.l.b16 %v285
        %v421 = vunpack.c.l.b16 %v286
        %v422 = vunpack.c.l.b16 %v287
        %v423 = vunpack.c.l.b16 %v288
        %v424 = vunpack.c.l.b16 %v289
        %v425 = vunpack.c.l.b16 %v290
        %v426 = vpack.c.b16 %v411, %v410
        %v427 = vpack.c.b16 %v413, %v412
        %v428 = vpack.c.b16 %v415, %v414
        %v429 = vpack.c.b16 %v417, %v416
        %v430 = vpack.c.b16 %v419, %v418
        %v431 = vpack.c.b16 %v421, %v420
        %v432 = vpack.c.b16 %v423, %v422
        %v433 = vpack.c.b16 %v425, %v424
        %442 = vmatprep.subr.bf16.mxu0 0
        %443 = vmatpush1.bf16.msra.mxu0 %v426
        %444 = vmatprep.subr.bf16.mxu0 0
        %445 = vmatpush1.bf16.msra.mxu0 %v427
        %446 = vmatprep.subr.bf16.mxu0 0
        %447 = vmatpush1.bf16.msra.mxu0 %v428
        %448 = vmatprep.subr.bf16.mxu0 0
        %449 = vmatpush1.bf16.msra.mxu0 %v429
        %450 = vmatprep.subr.bf16.mxu0 0
        %451 = vmatpush1.bf16.msra.mxu0 %v430
        %452 = vmatprep.subr.bf16.mxu0 0
        %453 = vmatpush1.bf16.msra.mxu0 %v431
        %454 = vmatprep.subr.bf16.mxu0 0
        %455 = vmatpush1.bf16.msra.mxu0 %v432
        %456 = vmatprep.subr.bf16.mxu0 0
        %457 = vmatpush1.bf16.msra.mxu0 %v433
        %458 = vmatprep.subr.bf16.mxu0 0
        %459 = vmatpush1.bf16.msra.mxu0 0
        %460 = vmatprep.subr.bf16.mxu0 0
        %461 = vmatpush1.bf16.msra.mxu0 0
        %462 = vmatprep.subr.bf16.mxu0 0
        %463 = vmatpush1.bf16.msra.mxu0 0
        %464 = vmatprep.subr.bf16.mxu0 0
        %465 = vmatpush1.bf16.msra.mxu0 0
        %466 = vmatprep.subr.bf16.mxu0 0
        %467 = vmatpush1.bf16.msra.mxu0 0
        %468 = vmatprep.subr.bf16.mxu0 0
        %469 = vmatpush1.bf16.msra.mxu0 0
        %470 = vmatprep.subr.bf16.mxu0 0
        %471 = vmatpush1.bf16.msra.mxu0 0
        %472 = vmatprep.subr.bf16.mxu0 0
        %473 = vmatpush1.bf16.msra.mxu0 0
        %474 = vmatprep.mubr.bf16.mxu0 0
        %475 = vmatmul.mubr.bf16.gmra.mrb[0].mxu0 %v362
        %v476 = vpop.f32.mrb[0].mxu0
        %v477 = vadd.f32 %v296, %v476
        %v478 = vpop.f32.mrb[0].mxu0
        %v479 = vpop.f32.mrb[0].mxu0
        %v480 = vadd.f32 %v296, %v479
        %v481 = vpop.f32.mrb[0].mxu0
        %482 = vmatprep.mubr.bf16.mxu0 0
        %483 = vmatmul.mubr.bf16.gmra.mrb[0].mxu0 %v363
        %v484 = vpop.f32.mrb[0].mxu0
        %v485 = vadd.f32 %v296, %v484
        %v486 = vpop.f32.mrb[0].mxu0
        %v487 = vpop.f32.mrb[0].mxu0
        %v488 = vadd.f32 %v296, %v487
        %v489 = vpop.f32.mrb[0].mxu0
        %490 = vmatprep.mubr.bf16.mxu0 0
        %491 = vmatmul.mubr.bf16.gmra.mrb[0].mxu0 %v364
        %v492 = vpop.f32.mrb[0].mxu0
        %v493 = vadd.f32 %v296, %v492
        %v494 = vpop.f32.mrb[0].mxu0
        %v495 = vpop.f32.mrb[0].mxu0
        %v496 = vadd.f32 %v296, %v495
        %v497 = vpop.f32.mrb[0].mxu0
        %498 = vmatprep.mubr.bf16.mxu0 0
        %499 = vmatmul.mubr.bf16.gmra.mrb[0].mxu0 %v365
        %v500 = vpop.f32.mrb[0].mxu0
        %v501 = vadd.f32 %v296, %v500
        %v502 = vpop.f32.mrb[0].mxu0
        %v503 = vpop.f32.mrb[0].mxu0
        %v504 = vadd.f32 %v296, %v503
        %v505 = vpop.f32.mrb[0].mxu0
        %506 = vmatprep.mubr.bf16.mxu0 0
        %507 = vmatmul.mubr.bf16.gmra.mrb[0].mxu0 %v366
        %v508 = vpop.f32.mrb[0].mxu0
        %v509 = vadd.f32 %v296, %v508
        %v510 = vpop.f32.mrb[0].mxu0
        %v511 = vpop.f32.mrb[0].mxu0
        %v512 = vadd.f32 %v296, %v511
        %v513 = vpop.f32.mrb[0].mxu0
        %514 = vmatprep.mubr.bf16.mxu0 0
        %515 = vmatmul.mubr.bf16.gmra.mrb[0].mxu0 %v367
        %v516 = vpop.f32.mrb[0].mxu0
        %v517 = vadd.f32 %v296, %v516
        %v518 = vpop.f32.mrb[0].mxu0
        %v519 = vpop.f32.mrb[0].mxu0
        %v520 = vadd.f32 %v296, %v519
        %v521 = vpop.f32.mrb[0].mxu0
        %522 = vmatprep.mubr.bf16.mxu0 0
        %523 = vmatmul.mubr.bf16.gmra.mrb[0].mxu0 %v368
        %v524 = vpop.f32.mrb[0].mxu0
        %v525 = vadd.f32 %v296, %v524
        %v526 = vpop.f32.mrb[0].mxu0
        %v527 = vpop.f32.mrb[0].mxu0
        %v528 = vadd.f32 %v296, %v527
        %v529 = vpop.f32.mrb[0].mxu0
        %530 = vmatprep.mubr.bf16.mxu0 0
        %531 = vmatmul.mubr.bf16.gmra.mrb[0].mxu0 %v369
        %v532 = vpop.f32.mrb[0].mxu0
        %v533 = vadd.f32 %v296, %v532
        %v534 = vpop.f32.mrb[0].mxu0
        %v535 = vpop.f32.mrb[0].mxu0
        %v536 = vadd.f32 %v296, %v535
        %v537 = vpop.f32.mrb[0].mxu0
        %538 = vmatprep.mubr.bf16.mxu0 0
        %539 = vmatmul.mubr.bf16.gmra.mrb[0].mxu0 %v370
        %v540 = vpop.f32.mrb[0].mxu0
        %v541 = vadd.f32 %v296, %v540
        %v542 = vpop.f32.mrb[0].mxu0
        %v543 = vpop.f32.mrb[0].mxu0
        %v544 = vadd.f32 %v296, %v543
        %v545 = vpop.f32.mrb[0].mxu0
        %546 = vmatprep.mubr.bf16.mxu0 0
        %547 = vmatmul.mubr.bf16.gmra.mrb[0].mxu0 %v371
        %v548 = vpop.f32.mrb[0].mxu0
        %v549 = vadd.f32 %v296, %v548
        %v550 = vpop.f32.mrb[0].mxu0
        %v551 = vpop.f32.mrb[0].mxu0
        %v552 = vadd.f32 %v296, %v551
        %v553 = vpop.f32.mrb[0].mxu0
        %554 = vmatprep.mubr.bf16.mxu0 0
        %555 = vmatmul.mubr.bf16.gmra.mrb[0].mxu0 %v372
        %v556 = vpop.f32.mrb[0].mxu0
        %v557 = vadd.f32 %v296, %v556
        %v558 = vpop.f32.mrb[0].mxu0
        %v559 = vpop.f32.mrb[0].mxu0
        %v560 = vadd.f32 %v296, %v559
        %v561 = vpop.f32.mrb[0].mxu0
        %562 = vmatprep.mubr.bf16.mxu0 0
        %563 = vmatmul.mubr.bf16.gmra.mrb[0].mxu0 %v373
        %v564 = vpop.f32.mrb[0].mxu0
        %v565 = vadd.f32 %v296, %v564
        %v566 = vpop.f32.mrb[0].mxu0
        %v567 = vpop.f32.mrb[0].mxu0
        %v568 = vadd.f32 %v296, %v567
        %v569 = vpop.f32.mrb[0].mxu0
        %570 = vmatprep.mubr.bf16.mxu0 0
        %571 = vmatmul.mubr.bf16.gmra.mrb[0].mxu0 %v374
        %v572 = vpop.f32.mrb[0].mxu0
        %v573 = vadd.f32 %v296, %v572
        %v574 = vpop.f32.mrb[0].mxu0
        %v575 = vpop.f32.mrb[0].mxu0
        %v576 = vadd.f32 %v296, %v575
        %v577 = vpop.f32.mrb[0].mxu0
        %578 = vmatprep.mubr.bf16.mxu0 0
        %579 = vmatmul.mubr.bf16.gmra.mrb[0].mxu0 %v375
        %v580 = vpop.f32.mrb[0].mxu0
        %v581 = vadd.f32 %v296, %v580
        %v582 = vpop.f32.mrb[0].mxu0
        %v583 = vpop.f32.mrb[0].mxu0
        %v584 = vadd.f32 %v296, %v583
        %v585 = vpop.f32.mrb[0].mxu0
        %586 = vmatprep.mubr.bf16.mxu0 0
        %587 = vmatmul.mubr.bf16.gmra.mrb[0].mxu0 %v376
        %v588 = vpop.f32.mrb[0].mxu0
        %v589 = vadd.f32 %v296, %v588
        %v590 = vpop.f32.mrb[0].mxu0
        %v591 = vpop.f32.mrb[0].mxu0
        %v592 = vadd.f32 %v296, %v591
        %v593 = vpop.f32.mrb[0].mxu0
        %594 = vmatprep.mubr.bf16.mxu0 0
        %595 = vmatmul.mubr.bf16.gmra.mrb[0].mxu0 %v377
        %v596 = vpop.f32.mrb[0].mxu0
        %v597 = vadd.f32 %v296, %v596
        %v598 = vpop.f32.mrb[0].mxu0
        %v599 = vpop.f32.mrb[0].mxu0
        %v600 = vadd.f32 %v296, %v599
        %v601 = vpop.f32.mrb[0].mxu0
        %602 = vdwg.mxu0
        %v603 = vmax.f32 %v477, 0.0
        %v604 = vmax.f32 %v480, 0.0
        %v605 = vmax.f32 %v485, 0.0
        %v606 = vmax.f32 %v488, 0.0
        %v607 = vmax.f32 %v493, 0.0
        %v608 = vmax.f32 %v496, 0.0
        %v609 = vmax.f32 %v501, 0.0
        %v610 = vmax.f32 %v504, 0.0
        %v611 = vmax.f32 %v509, 0.0
        %v612 = vmax.f32 %v512, 0.0
        %v613 = vmax.f32 %v517, 0.0
        %v614 = vmax.f32 %v520, 0.0
        %v615 = vmax.f32 %v525, 0.0
        %v616 = vmax.f32 %v528, 0.0
        %v617 = vmax.f32 %v533, 0.0
        %v618 = vmax.f32 %v536, 0.0
        %v619 = vmax.f32 %v541, 0.0
        %v620 = vmax.f32 %v544, 0.0
        %v621 = vmax.f32 %v549, 0.0
        %v622 = vmax.f32 %v552, 0.0
        %v623 = vmax.f32 %v557, 0.0
        %v624 = vmax.f32 %v560, 0.0
        %v625 = vmax.f32 %v565, 0.0
        %v626 = vmax.f32 %v568, 0.0
        %v627 = vmax.f32 %v573, 0.0
        %v628 = vmax.f32 %v576, 0.0
        %v629 = vmax.f32 %v581, 0.0
        %v630 = vmax.f32 %v584, 0.0
        %v631 = vmax.f32 %v589, 0.0
        %v632 = vmax.f32 %v592, 0.0
        %v633 = vmax.f32 %v597, 0.0
        %v634 = vmax.f32 %v600, 0.0
        %v635 = vpack.c.bf16 %v604, %v603
        %v636 = vpack.c.bf16 %v606, %v605
        %v637 = vpack.c.bf16 %v608, %v607
        %v638 = vpack.c.bf16 %v610, %v609
        %v639 = vpack.c.bf16 %v612, %v611
        %v640 = vpack.c.bf16 %v614, %v613
        %v641 = vpack.c.bf16 %v616, %v615
        %v642 = vpack.c.bf16 %v618, %v617
        %v643 = vpack.c.bf16 %v620, %v619
        %v644 = vpack.c.bf16 %v622, %v621
        %v645 = vpack.c.bf16 %v624, %v623
        %v646 = vpack.c.bf16 %v626, %v625
        %v647 = vpack.c.bf16 %v628, %v627
        %v648 = vpack.c.bf16 %v630, %v629
        %v649 = vpack.c.bf16 %v632, %v631
        %v650 = vpack.c.bf16 %v634, %v633
        %v667 = vunpack.c.l.b16 %v635
        %v668 = vunpack.c.h.b16 %v635
        %v669 = vunpack.c.l.b16 %v636
        %v670 = vunpack.c.h.b16 %v636
        %v671 = vunpack.c.l.b16 %v637
        %v672 = vunpack.c.h.b16 %v637
        %v673 = vunpack.c.l.b16 %v638
        %v674 = vunpack.c.h.b16 %v638
        %v675 = vunpack.c.l.b16 %v639
        %v676 = vunpack.c.h.b16 %v639
        %v677 = vunpack.c.l.b16 %v640
        %v678 = vunpack.c.h.b16 %v640
        %v679 = vunpack.c.l.b16 %v641
        %v680 = vunpack.c.h.b16 %v641
        %v681 = vunpack.c.l.b16 %v642
        %v682 = vunpack.c.h.b16 %v642
        %v683 = vunpack.c.l.b16 %v643
        %v684 = vunpack.c.h.b16 %v643
        %v685 = vunpack.c.l.b16 %v644
        %v686 = vunpack.c.h.b16 %v644
        %v687 = vunpack.c.l.b16 %v645
        %v688 = vunpack.c.h.b16 %v645
        %v689 = vunpack.c.l.b16 %v646
        %v690 = vunpack.c.h.b16 %v646
        %v691 = vunpack.c.l.b16 %v647
        %v692 = vunpack.c.h.b16 %v647
        %v693 = vunpack.c.l.b16 %v648
        %v694 = vunpack.c.h.b16 %v648
        %v695 = vunpack.c.l.b16 %v649
        %v696 = vunpack.c.h.b16 %v649
        %v697 = vunpack.c.l.b16 %v650
        %v698 = vunpack.c.h.b16 %v650
        %v699 = vpack.c.b16 %v667, %v667
        %v700 = vpack.c.b16 %v668, %v668
        %v701 = vpack.c.b16 %v669, %v669
        %v702 = vpack.c.b16 %v670, %v670
        %v703 = vpack.c.b16 %v671, %v671
        %v704 = vpack.c.b16 %v672, %v672
        %v705 = vpack.c.b16 %v673, %v673
        %v706 = vpack.c.b16 %v674, %v674
        %v707 = vpack.c.b16 %v675, %v675
        %v708 = vpack.c.b16 %v676, %v676
        %v709 = vpack.c.b16 %v677, %v677
        %v710 = vpack.c.b16 %v678, %v678
        %v711 = vpack.c.b16 %v679, %v679
        %v712 = vpack.c.b16 %v680, %v680
        %v713 = vpack.c.b16 %v681, %v681
        %v714 = vpack.c.b16 %v682, %v682
        %v715 = vpack.c.b16 %v683, %v683
        %v716 = vpack.c.b16 %v684, %v684
        %v717 = vpack.c.b16 %v685, %v685
        %v718 = vpack.c.b16 %v686, %v686
        %v719 = vpack.c.b16 %v687, %v687
        %v720 = vpack.c.b16 %v688, %v688
        %v721 = vpack.c.b16 %v689, %v689
        %v722 = vpack.c.b16 %v690, %v690
        %v723 = vpack.c.b16 %v691, %v691
        %v724 = vpack.c.b16 %v692, %v692
        %v725 = vpack.c.b16 %v693, %v693
        %v726 = vpack.c.b16 %v694, %v694
        %v727 = vpack.c.b16 %v695, %v695
        %v728 = vpack.c.b16 %v696, %v696
        %v729 = vpack.c.b16 %v697, %v697
        %v730 = vpack.c.b16 %v698, %v698
        %763 = vst [vmem:[%s236] sm:$0xf] %v699
        %764 = vst [vmem:[%s236 + $0x4] sm:$0xf] %v700
        %765 = vst [vmem:[%s236 + $0x8] sm:$0xf] %v701
        %766 = vst [vmem:[%s236 + $0xc] sm:$0xf] %v702
        %767 = vst [vmem:[%s236 + $0x10] sm:$0xf] %v703
        %768 = vst [vmem:[%s236 + $0x14] sm:$0xf] %v704
        %769 = vst [vmem:[%s236 + $0x18] sm:$0xf] %v705
        %770 = vst [vmem:[%s236 + $0x1c] sm:$0xf] %v706
        %771 = vst [vmem:[%s236 + $0x20] sm:$0xf] %v707
        %772 = vst [vmem:[%s236 + $0x24] sm:$0xf] %v708
        %773 = vst [vmem:[%s236 + $0x28] sm:$0xf] %v709
        %774 = vst [vmem:[%s236 + $0x2c] sm:$0xf] %v710
        %775 = vst [vmem:[%s236 + $0x30] sm:$0xf] %v711
        %776 = vst [vmem:[%s236 + $0x34] sm:$0xf] %v712
        %777 = vst [vmem:[%s236 + $0x38] sm:$0xf] %v713
        %778 = vst [vmem:[%s236 + $0x3c] sm:$0xf] %v714
        %779 = vst [vmem:[%s236 + $0x40] sm:$0xf] %v715
        %780 = vst [vmem:[%s236 + $0x44] sm:$0xf] %v716
        %781 = vst [vmem:[%s236 + $0x48] sm:$0xf] %v717
        %782 = vst [vmem:[%s236 + $0x4c] sm:$0xf] %v718
        %783 = vst [vmem:[%s236 + $0x50] sm:$0xf] %v719
        %784 = vst [vmem:[%s236 + $0x54] sm:$0xf] %v720
        %785 = vst [vmem:[%s236 + $0x58] sm:$0xf] %v721
        %786 = vst [vmem:[%s236 + $0x5c] sm:$0xf] %v722
        %787 = vst [vmem:[%s236 + $0x60] sm:$0xf] %v723
        %788 = vst [vmem:[%s236 + $0x64] sm:$0xf] %v724
        %789 = vst [vmem:[%s236 + $0x68] sm:$0xf] %v725
        %790 = vst [vmem:[%s236 + $0x6c] sm:$0xf] %v726
        %791 = vst [vmem:[%s236 + $0x70] sm:$0xf] %v727
        %792 = vst [vmem:[%s236 + $0x74] sm:$0xf] %v728
        %793 = vst [vmem:[%s236 + $0x78] sm:$0xf] %v729
        %794 = vst [vmem:[%s236 + $0x7c] sm:$0xf] %v730
        %s795 = sand.u32 %s121, 1
        %s796 = scalar_lea.sflag [#allocation4], %s795
        %s797 = sand.u32 %s121, 1
        %s798 = smul.addr %s797, 128
        %s799 = scalar_lea.vmem [#allocation7], %s798
        // Predicated region
        $region41: #{tpu_custom_call.1} parent=31 // pred_check
          %p800 = pneg %p131
        $region42: #{tpu_custom_call.1} parent=31 // pred_check_branch
          %802 = sbr.rel (%p800) target = $region44
        $region43: #{tpu_custom_call.1} parent=31 // pred_region
          %s803 = smul.u32 32, %s25
          %s805 = ssub.s32 2048, 2048
          %806 = vsyncadd %s796, %s805
          %s807 = sadd.s32 %s26, %s803
          %s808 = smul.addr %s807, 64
          %s809 = scalar_lea.hbm %s3, %s808
          %s810 = sshll.u32 %s799, 4
          %s811 = int_to_ptr.vmem [resolvable:$true] %s810
          %816 = dma.vmem_to_hbm [thread:$0]  %s811, 2048, %s809, %s796, 64, 64, 4
        $region44: #{tpu_custom_call.1} parent=31 // pred_fallthru
          _
      $region32: #{tpu_custom_call.1} parent=5 // pred_fallthru
        _
      %p817 = scmp.le.s32.totalorder 2, %s16
      // Predicated region
      $region45: #{tpu_custom_call.1} parent=5 // pred_check
        %p818 = pneg %p817
      $region46: #{tpu_custom_call.1} parent=5 // pred_check_branch
        %820 = sbr.rel (%p818) target = $region48
      $region47: #{tpu_custom_call.1} parent=5 // pred_region
        %s821 = ssub.s32 %s16, 2
        // Predicated region
        $region49: #{tpu_custom_call.1} parent=47 // pred_check
          %p822 = pneg %p137
        $region50: #{tpu_custom_call.1} parent=47 // pred_check_branch
          %824 = sbr.rel (%p822) target = $region52
        $region51: #{tpu_custom_call.1} parent=47 // pred_region
          %s825 = sand.u32 %s122, 1
          %s826 = scalar_lea.sflag [#allocation4], %s825
          %s827 = sand.u32 %s122, 1
          %s828 = smul.addr %s827, 128
          %s829 = scalar_lea.vmem [#allocation7], %s828
          %830 = dma.done %s826, 2048
        $region52: #{tpu_custom_call.1} parent=47 // pred_fallthru
          _
      $region48: #{tpu_custom_call.1} parent=5 // pred_fallthru
        _
    $region6: #{tpu_custom_call.1} parent=1 // loop_footer
      %s20 = sadd.s32 1, %s16
    $region7: #{tpu_custom_call.1} parent=1 // loop_footer_branch
      %15 = sbr.rel target = $region3
    $region8: #{tpu_custom_call.1} parent=1 // loop_exit
      _
    %831 = vsyncpa [#allocation3], 1
    %s832 = scalar_lea.sflag [#allocation3], 1
    %833 = vsyncpa %s832, 1
    %834 = vsyncpa [#allocation6], 1
    %835 = vsyncpa [#allocation4], 1
    %s836 = scalar_lea.sflag [#allocation4], 1
    %837 = vsyncpa %s836, 1

</llo_original>
